<compile_context>
chip_gen: v5e
topology: v5e:2x2
jax: 0.10.0
libtpu: 0.0.40
codegen_flags: <defaults>
</compile_context>

<pallas_src>
import functools

import jax
import jax.numpy as jnp
from jax import lax
from jax.experimental import pallas as pl
from jax.experimental.pallas import tpu as pltpu


def _attention_kernel(x_ref, wq_ref, wk_ref, wv_ref, wp_ref, bproj_ref,
                      o_ref, acc_ref, *, scale):
    h = pl.program_id(1)

    @pl.when(h == 0)
    def _init():
        acc_ref[...] = jnp.zeros_like(acc_ref)

    x = x_ref[0]          # (N, C)  bf16   (same block for every h -> stays resident)
    wq = wq_ref[0]        # (C, D)  bf16
    wk = wk_ref[0]        # (C, D)  bf16
    wv = wv_ref[0]        # (C, D)  bf16
    wp = wp_ref[0]        # (D, C)  bf16

    # Per-head Q/K/V projections on the MXU, f32 accumulation.
    q = jnp.dot(x, wq, preferred_element_type=jnp.float32)    # (N, D) f32
    k = jnp.dot(x, wk, preferred_element_type=jnp.float32)    # (N, D) f32
    v = jnp.dot(x, wv, preferred_element_type=jnp.float32)    # (N, D) f32

    # Scale q (N*D elements) instead of the (N, N) logits; fold into the bf16 cast.
    q = (q * scale).astype(jnp.bfloat16)
    k = k.astype(jnp.bfloat16)
    v = v.astype(jnp.bfloat16)

    # s = q @ k^T : contract head_dim of both operands (no materialized transpose).
    s = lax.dot_general(q, k, (((1,), (1,)), ((), ())),
                        preferred_element_type=jnp.float32)    # (N, N) f32

    # Numerically stable softmax; statistics stay in f32.
    m = jnp.max(s, axis=-1, keepdims=True)
    p = jnp.exp(s - m)
    l = jnp.sum(p, axis=-1, keepdims=True)

    o_h = jnp.dot(p.astype(jnp.bfloat16), v,
                  preferred_element_type=jnp.float32)          # (N, D) f32
    # Normalize the (N, D) head output, not the (N, N) probs; approx recip -> EUP slot.
    o_h = o_h * pl.reciprocal(l, approx=True)

    # Per-head slice of the output projection, accumulated over heads in f32 scratch.
    acc_ref[...] += jnp.dot(o_h.astype(jnp.bfloat16), wp,
                            preferred_element_type=jnp.float32)  # (N, C) f32

    @pl.when(h == pl.num_programs(1) - 1)
    def _finalize():
        # Bias added exactly once, in f32, in the epilogue; single HBM writeback.
        o_ref[0] = (acc_ref[...] + bproj_ref[...]).astype(o_ref.dtype)


def attention_forward(x, w_qkv, w_proj, b_proj, *, num_heads):
    """x: (B, N, C) f32; w_qkv: (3C, C) (PyTorch nn.Linear layout); w_proj: (C, C); b_proj: (C,)."""
    B, N, C = x.shape
    H = num_heads
    assert C % H == 0
    D = C // H
    scale = float(D) ** -0.5

    # --- glue: rearrange PyTorch-layout weights into per-head slabs, cast matmul operands to bf16.
    # qkv output-feature index f = t*(H*D) + h*D + d  (t in {q,k,v}).
    w_qkv_r = w_qkv.reshape(3, H, D, C)                                    # (3, H, D, C)
    w_q = jnp.transpose(w_qkv_r[0], (0, 2, 1)).astype(jnp.bfloat16)        # (H, C, D)
    w_k = jnp.transpose(w_qkv_r[1], (0, 2, 1)).astype(jnp.bfloat16)        # (H, C, D)
    w_v = jnp.transpose(w_qkv_r[2], (0, 2, 1)).astype(jnp.bfloat16)        # (H, C, D)
    # proj in-feature index = h*D + d  ->  per-head (D, C) slab so y = sum_h o_h @ w_p[h].
    w_p = jnp.transpose(w_proj.reshape(C, H, D), (1, 2, 0)).astype(jnp.bfloat16)  # (H, D, C)
    b_p = b_proj.reshape(1, C).astype(jnp.float32)                         # bias stays f32
    x_bf = x.astype(jnp.bfloat16)

    kernel = functools.partial(_attention_kernel, scale=scale)

    return pl.pallas_call(
        kernel,
        out_shape=jax.ShapeDtypeStruct((B, N, C), x.dtype),
        grid_spec=pltpu.PrefetchScalarGridSpec(
            num_scalar_prefetch=0,
            grid=(B, H),                                    # reduction (head) axis last
            in_specs=[
                pl.BlockSpec((1, N, C), lambda b, h: (b, 0, 0)),   # x (constant across h)
                pl.BlockSpec((1, C, D), lambda b, h: (h, 0, 0)),   # w_q per head
                pl.BlockSpec((1, C, D), lambda b, h: (h, 0, 0)),   # w_k per head
                pl.BlockSpec((1, C, D), lambda b, h: (h, 0, 0)),   # w_v per head
                pl.BlockSpec((1, D, C), lambda b, h: (h, 0, 0)),   # w_proj per head
                pl.BlockSpec((1, C), lambda b, h: (0, 0)),         # bias (constant)
            ],
            out_specs=pl.BlockSpec((1, N, C), lambda b, h: (b, 0, 0)),  # resident across h
            scratch_shapes=[pltpu.VMEM((N, C), jnp.float32)],           # f32 accumulator slab
        ),
        compiler_params=pltpu.CompilerParams(
            dimension_semantics=("parallel", "arbitrary"),
        ),
    )(x_bf, w_q, w_k, w_v, w_p, b_p)


def _reference(x, w_qkv, w_proj, b_proj, num_heads):
    B, N, C = x.shape
    D = C // num_heads
    qkv = jnp.einsum("bnc,oc->bno", x, w_qkv)                  # (B, N, 3C)
    qkv = qkv.reshape(B, N, 3, num_heads, D).transpose(2, 0, 3, 1, 4)
    q, k, v = qkv[0], qkv[1], qkv[2]                           # (B, H, N, D)
    s = jnp.einsum("bhnd,bhmd->bhnm", q, k) * (D ** -0.5)
    p = jax.nn.softmax(s, axis=-1)
    o = jnp.einsum("bhnm,bhmd->bhnd", p, v)                    # (B, H, N, D)
    o = o.transpose(0, 2, 1, 3).reshape(B, N, C)
    return jnp.einsum("bnc,oc->bno", o, w_proj) + b_proj


if __name__ == "__main__":
    B, N, C, H = 2, 8, 32, 8

    key = jax.random.PRNGKey(0)
    kx, kq, kp, kb = jax.random.split(key, 4)
    x = jax.random.normal(kx, (B, N, C), dtype=jnp.float32)
    # PyTorch nn.Linear layout: (out_features, in_features)
    w_qkv = jax.random.normal(kq, (3 * C, C), dtype=jnp.float32) * (C ** -0.5)
    w_proj = jax.random.normal(kp, (C, C), dtype=jnp.float32) * (C ** -0.5)
    b_proj = jax.random.normal(kb, (C,), dtype=jnp.float32) * 0.01

    out = attention_forward(x, w_qkv, w_proj, b_proj, num_heads=H)
    out = jax.block_until_ready(out)

    ref = _reference(x, w_qkv, w_proj, b_proj, H)
    assert out.shape == (B, N, C)
    # Tolerance accounts for intentional bf16 matmul operands (f32 accumulation / softmax).
    assert jnp.allclose(out, ref, atol=5e-2, rtol=5e-2), "mismatch vs reference"

    print("KERNEL_OK")
</pallas_src>

<mosaic_0001>
module attributes {stable_mosaic.version = 11 : i64} {
  func.func @_attention_kernel(%arg0: i32, %arg1: i32, %arg2: memref<1x8x32xbf16, #tpu.memory_space<vmem>>, %arg3: memref<1x32x4xbf16, #tpu.memory_space<vmem>>, %arg4: memref<1x32x4xbf16, #tpu.memory_space<vmem>>, %arg5: memref<1x32x4xbf16, #tpu.memory_space<vmem>>, %arg6: memref<1x4x32xbf16, #tpu.memory_space<vmem>>, %arg7: memref<1x32xf32, #tpu.memory_space<vmem>>, %arg8: memref<1x8x32xf32, #tpu.memory_space<vmem>>, %arg9: memref<8x32xf32, #tpu.memory_space<vmem>>) attributes {dimension_semantics = [#tpu.dimension_semantics<parallel>, #tpu.dimension_semantics<arbitrary>], iteration_bounds = array<i64: 2, 8>, scalar_prefetch = 0 : i64, scratch_operands = 1 : i64, tpu.core_type = #tpu.core_type<tc>, window_params = [{transform_indices = @transform_0, window_bounds = array<i64: 1, 8, 32>}, {transform_indices = @transform_1, window_bounds = array<i64: 1, 32, 4>}, {transform_indices = @transform_2, window_bounds = array<i64: 1, 32, 4>}, {transform_indices = @transform_3, window_bounds = array<i64: 1, 32, 4>}, {transform_indices = @transform_4, window_bounds = array<i64: 1, 4, 32>}, {pipeline_mode = #tpu.pipeline_mode<synchronous>, transform_indices = @transform_5, window_bounds = array<i64: 1, 32>}, {transform_indices = @transform_6, window_bounds = array<i64: 1, 8, 32>}]} {
    %c0_i32 = arith.constant 0 : i32
    %0 = arith.cmpi eq, %arg1, %c0_i32 : i32
    %1 = arith.extui %0 : i1 to i32
    %c0_i32_0 = arith.constant 0 : i32
    %2 = arith.cmpi ne, %1, %c0_i32_0 : i32
    scf.if %2 {
      %cst_28 = arith.constant 0.000000e+00 : f32
      %42 = vector.broadcast %cst_28 : f32 to vector<8x32xf32>
      %c0_29 = arith.constant 0 : index
      %c0_30 = arith.constant 0 : index
      %43 = vector.load %arg9[%c0_29, %c0_30] : memref<8x32xf32, #tpu.memory_space<vmem>>, vector<8x32xf32>
      tpu.vector_store %arg9[%c0_29, %c0_30], %42 {strides = array<i32>} : memref<8x32xf32, #tpu.memory_space<vmem>>, vector<8x32xf32>,
    } else {
    }
    %c0 = arith.constant 0 : index
    %c0_1 = arith.constant 0 : index
    %c0_2 = arith.constant 0 : index
    %3 = vector.load %arg2[%c0, %c0_1, %c0_2] : memref<1x8x32xbf16, #tpu.memory_space<vmem>>, vector<1x8x32xbf16>
    %4 = vector.shape_cast %3 : vector<1x8x32xbf16> to vector<8x32xbf16>
    %c0_3 = arith.constant 0 : index
    %c0_4 = arith.constant 0 : index
    %c0_5 = arith.constant 0 : index
    %5 = vector.load %arg3[%c0_3, %c0_4, %c0_5] : memref<1x32x4xbf16, #tpu.memory_space<vmem>>, vector<1x32x4xbf16>
    %6 = vector.shape_cast %5 : vector<1x32x4xbf16> to vector<32x4xbf16>
    %c0_6 = arith.constant 0 : index
    %c0_7 = arith.constant 0 : index
    %c0_8 = arith.constant 0 : index
    %7 = vector.load %arg4[%c0_6, %c0_7, %c0_8] : memref<1x32x4xbf16, #tpu.memory_space<vmem>>, vector<1x32x4xbf16>
    %8 = vector.shape_cast %7 : vector<1x32x4xbf16> to vector<32x4xbf16>
    %c0_9 = arith.constant 0 : index
    %c0_10 = arith.constant 0 : index
    %c0_11 = arith.constant 0 : index
    %9 = vector.load %arg5[%c0_9, %c0_10, %c0_11] : memref<1x32x4xbf16, #tpu.memory_space<vmem>>, vector<1x32x4xbf16>
    %10 = vector.shape_cast %9 : vector<1x32x4xbf16> to vector<32x4xbf16>
    %c0_12 = arith.constant 0 : index
    %c0_13 = arith.constant 0 : index
    %c0_14 = arith.constant 0 : index
    %11 = vector.load %arg6[%c0_12, %c0_13, %c0_14] : memref<1x4x32xbf16, #tpu.memory_space<vmem>>, vector<1x4x32xbf16>
    %12 = vector.shape_cast %11 : vector<1x4x32xbf16> to vector<4x32xbf16>
    %cst = arith.constant dense<0.000000e+00> : vector<8x4xf32>
    %13 = tpu.matmul %4, %6, %cst {dimension_numbers = #tpu.dot_dimension_numbers<[1], [0], [0], [1], [0, 0, 1, 1], [], []>} : vector<8x32xbf16>, vector<32x4xbf16>, vector<8x4xf32> -> vector<8x4xf32>
    %cst_15 = arith.constant dense<0.000000e+00> : vector<8x4xf32>
    %14 = tpu.matmul %4, %8, %cst_15 {dimension_numbers = #tpu.dot_dimension_numbers<[1], [0], [0], [1], [0, 0, 1, 1], [], []>} : vector<8x32xbf16>, vector<32x4xbf16>, vector<8x4xf32> -> vector<8x4xf32>
    %cst_16 = arith.constant dense<0.000000e+00> : vector<8x4xf32>
    %15 = tpu.matmul %4, %10, %cst_16 {dimension_numbers = #tpu.dot_dimension_numbers<[1], [0], [0], [1], [0, 0, 1, 1], [], []>} : vector<8x32xbf16>, vector<32x4xbf16>, vector<8x4xf32> -> vector<8x4xf32>
    %cst_17 = arith.constant 5.000000e-01 : f32
    %16 = vector.broadcast %cst_17 : f32 to vector<8x4xf32>
    %17 = arith.mulf %13, %16 : vector<8x4xf32>
    %18 = arith.truncf %17 : vector<8x4xf32> to vector<8x4xbf16>
    %19 = arith.truncf %14 : vector<8x4xf32> to vector<8x4xbf16>
    %20 = arith.truncf %15 : vector<8x4xf32> to vector<8x4xbf16>
    %cst_18 = arith.constant dense<0.000000e+00> : vector<8x8xf32>
    %21 = tpu.matmul %18, %19, %cst_18 {dimension_numbers = #tpu.dot_dimension_numbers<[1], [1], [0], [0], [0, 0, 1, 0], [], []>} : vector<8x4xbf16>, vector<8x4xbf16>, vector<8x8xf32> -> vector<8x8xf32>
    %cst_19 = arith.constant dense<0xFF800000> : vector<8xf32>
    %22 = vector.multi_reduction <maximumf>, %21, %cst_19 [1] : vector<8x8xf32> to vector<8xf32>
    %23 = vector.shape_cast %22 : vector<8xf32> to vector<8x1xf32>
    %24 = vector.broadcast %23 : vector<8x1xf32> to vector<8x8xf32>
    %25 = arith.subf %21, %24 : vector<8x8xf32>
    %26 = math.exp %25 : vector<8x8xf32>
    %cst_20 = arith.constant dense<0.000000e+00> : vector<8xf32>
    %27 = vector.multi_reduction <add>, %26, %cst_20 [1] : vector<8x8xf32> to vector<8xf32>
    %28 = vector.shape_cast %27 : vector<8xf32> to vector<8x1xf32>
    %29 = arith.truncf %26 : vector<8x8xf32> to vector<8x8xbf16>
    %cst_21 = arith.constant dense<0.000000e+00> : vector<8x4xf32>
    %30 = tpu.matmul %29, %20, %cst_21 {dimension_numbers = #tpu.dot_dimension_numbers<[1], [0], [0], [1], [0, 0, 1, 1], [], []>} : vector<8x8xbf16>, vector<8x4xbf16>, vector<8x4xf32> -> vector<8x4xf32>
    %31 = tpu.reciprocal %28 {approx = true} : vector<8x1xf32> -> vector<8x1xf32>
    %32 = vector.broadcast %31 : vector<8x1xf32> to vector<8x4xf32>
    %33 = arith.mulf %30, %32 : vector<8x4xf32>
    %c0_22 = arith.constant 0 : index
    %c0_23 = arith.constant 0 : index
    %34 = vector.load %arg9[%c0_22, %c0_23] : memref<8x32xf32, #tpu.memory_space<vmem>>, vector<8x32xf32>
    %35 = arith.truncf %33 : vector<8x4xf32> to vector<8x4xbf16>
    %cst_24 = arith.constant dense<0.000000e+00> : vector<8x32xf32>
    %36 = tpu.matmul %35, %12, %cst_24 {dimension_numbers = #tpu.dot_dimension_numbers<[1], [0], [0], [1], [0, 0, 1, 1], [], []>} : vector<8x4xbf16>, vector<4x32xbf16>, vector<8x32xf32> -> vector<8x32xf32>
    %37 = arith.addf %34, %36 : vector<8x32xf32>
    %c0_25 = arith.constant 0 : index
    %c0_26 = arith.constant 0 : index
    %38 = vector.load %arg9[%c0_25, %c0_26] : memref<8x32xf32, #tpu.memory_space<vmem>>, vector<8x32xf32>
    tpu.vector_store %arg9[%c0_25, %c0_26], %37 {strides = array<i32>} : memref<8x32xf32, #tpu.memory_space<vmem>>, vector<8x32xf32>,
    %c7_i32 = arith.constant 7 : i32
    %39 = arith.cmpi eq, %arg1, %c7_i32 : i32
    %40 = arith.extui %39 : i1 to i32
    %c0_i32_27 = arith.constant 0 : i32
    %41 = arith.cmpi ne, %40, %c0_i32_27 : i32
    scf.if %41 {
      %c0_28 = arith.constant 0 : index
      %c0_29 = arith.constant 0 : index
      %42 = vector.load %arg9[%c0_28, %c0_29] : memref<8x32xf32, #tpu.memory_space<vmem>>, vector<8x32xf32>
      %c0_30 = arith.constant 0 : index
      %c0_31 = arith.constant 0 : index
      %43 = vector.load %arg7[%c0_30, %c0_31] : memref<1x32xf32, #tpu.memory_space<vmem>>, vector<1x32xf32>
      %44 = vector.broadcast %43 : vector<1x32xf32> to vector<8x32xf32>
      %45 = arith.addf %42, %44 : vector<8x32xf32>
      %c0_32 = arith.constant 0 : index
      %c0_33 = arith.constant 0 : index
      %c0_34 = arith.constant 0 : index
      %46 = vector.load %arg8[%c0_32, %c0_33, %c0_34] : memref<1x8x32xf32, #tpu.memory_space<vmem>>, vector<1x8x32xf32>
      %47 = vector.shape_cast %46 : vector<1x8x32xf32> to vector<8x32xf32>
      %48 = vector.shape_cast %45 : vector<8x32xf32> to vector<1x8x32xf32>
      tpu.vector_store %arg8[%c0_32, %c0_33, %c0_34], %48 {strides = array<i32>} : memref<1x8x32xf32, #tpu.memory_space<vmem>>, vector<1x8x32xf32>,
    } else {
    }
    return
  }
  func.func @transform_0(%arg0: i32, %arg1: i32) -> (i32, i32, i32) {
    %c0_i32 = arith.constant 0 : i32
    %c0_i32_0 = arith.constant 0 : i32
    %c0_i32_1 = arith.constant 0 : i32
    return %arg0, %c0_i32, %c0_i32_0 : i32, i32, i32
  }
  func.func @transform_1(%arg0: i32, %arg1: i32) -> (i32, i32, i32) {
    %c0_i32 = arith.constant 0 : i32
    %c0_i32_0 = arith.constant 0 : i32
    %c0_i32_1 = arith.constant 0 : i32
    return %arg1, %c0_i32, %c0_i32_0 : i32, i32, i32
  }
  func.func @transform_2(%arg0: i32, %arg1: i32) -> (i32, i32, i32) {
    %c0_i32 = arith.constant 0 : i32
    %c0_i32_0 = arith.constant 0 : i32
    %c0_i32_1 = arith.constant 0 : i32
    return %arg1, %c0_i32, %c0_i32_0 : i32, i32, i32
  }
  func.func @transform_3(%arg0: i32, %arg1: i32) -> (i32, i32, i32) {
    %c0_i32 = arith.constant 0 : i32
    %c0_i32_0 = arith.constant 0 : i32
    %c0_i32_1 = arith.constant 0 : i32
    return %arg1, %c0_i32, %c0_i32_0 : i32, i32, i32
  }
  func.func @transform_4(%arg0: i32, %arg1: i32) -> (i32, i32, i32) {
    %c0_i32 = arith.constant 0 : i32
    %c0_i32_0 = arith.constant 0 : i32
    %c0_i32_1 = arith.constant 0 : i32
    return %arg1, %c0_i32, %c0_i32_0 : i32, i32, i32
  }
  func.func @transform_5(%arg0: i32, %arg1: i32) -> (i32, i32) {
    %c0_i32 = arith.constant 0 : i32
    %c0_i32_0 = arith.constant 0 : i32
    %c0_i32_1 = arith.constant 0 : i32
    return %c0_i32, %c0_i32_0 : i32, i32
  }
  func.func @transform_6(%arg0: i32, %arg1: i32) -> (i32, i32, i32) {
    %c0_i32 = arith.constant 0 : i32
    %c0_i32_0 = arith.constant 0 : i32
    %c0_i32_1 = arith.constant 0 : i32
    return %arg0, %c0_i32, %c0_i32_0 : i32, i32, i32
  }
}

</mosaic_0001>

<llo_original>
// kernel: tpu_custom_call.1
$region0: #{tpu_custom_call.1}
  #allocation0 [shape = 'u32[]', space=smem, size = 0x4, offset = 0x4, fixed_abs, tag = 'smem constant byte address 0x4 - core index']
  #allocation1 [shape = 'u32[72,128]{1,0:T(1,128)}', space=vmem, size = 0x9000, scoped, tag = 'internal scratch']
  #allocation2 [shape = 'f32[8,32]{1,0:T(8,128)}', space=vmem, size = 0x1000, scoped, tag = 'scratch operand']
  %s0 = inlined_call_operand.vmem [shape: bf16[2,8,32], index: 0, kind: input, shape index: {}]
  %s1 = inlined_call_operand.vmem [shape: bf16[8,32,4], index: 1, kind: input, shape index: {}]
  %s2 = inlined_call_operand.vmem [shape: bf16[8,32,4], index: 2, kind: input, shape index: {}]
  %s3 = inlined_call_operand.vmem [shape: bf16[8,32,4], index: 3, kind: input, shape index: {}]
  %s4 = inlined_call_operand.vmem [shape: bf16[8,4,32], index: 4, kind: input, shape index: {}]
  %s5 = inlined_call_operand.vmem [shape: f32[1,32], index: 5, kind: input, shape index: {}]
  %s6 = inlined_call_operand.hbm [shape: f32[2,8,32], index: 6, kind: output, shape index: {}]
  %s7 = sld [smem:[#allocation0]]
  $region65: #{tpu_custom_call.1} parent=0
    _
  %s9 = ssub.s32 1, %s7
  %s10 = scalar_select 0, %s9, %s7
  $region1: #{tpu_custom_call.1} parent=0
    #allocation3 [shape = 'u8[8192]{0}', space=vmem, size = 0x2000, scoped, tag = 'output window, operand 0']
    #allocation4 [shape = 's32[2]{0}', space=sflag, size = 0x8, scoped, tag = 'scoped memory for tpu_custom_call.1']
    %11 = vsyncpa [#allocation4], 0
    %s12 = scalar_lea.sflag [#allocation4], 1
    %13 = vsyncpa %s12, 0
    loop: start=0, step=1, limit=18
    $region2: #{tpu_custom_call.1} parent=1 // loop_pre_header
      _
    $region3: #{tpu_custom_call.1} parent=1 // loop_header
      %s15 = sphi 0, %s19
      %p16 = scmp.ge.s32.totalorder %s15, 18
      %s22 = sphi 0, %s34
      %s23 = sphi 0, %s30
      %s24 = sphi 0, %s22
      %s25 = sphi 0, %s23
      %s26 = sphi 0, %s24
      %s27 = sphi 0, %s25
      %s37 = sphi 0, %s39
      %s40 = sphi 0, %s37
      %s41 = sphi 0, %s40
      %s57 = sphi 0, %s41
      %s63 = sphi 0, %s65
      %s66 = sphi 0, %s63
      %s67 = sphi 0, %s66
      %s83 = sphi 0, %s67
      %s89 = sphi 0, %s91
      %s92 = sphi 0, %s89
      %s93 = sphi 0, %s92
      %s109 = sphi 0, %s93
      %s115 = sphi 0, %s117
      %s118 = sphi 0, %s115
      %s119 = sphi 0, %s118
      %s135 = sphi 0, %s119
      %s141 = sphi 0, %s143
      %s144 = sphi 0, %s141
      %s145 = sphi 0, %s144
      %s161 = sphi 0, %s145
      %s165 = sphi 0, %s165
      %s167 = sphi 0, %s165
      %s168 = sphi 0, %s167
      %s182 = sphi 0, %s168
      %s188 = sphi 0, %s190
      %s191 = sphi 0, %s188
      %s192 = sphi 0, %s191
      %s208 = sphi 0, %s192
    $region4: #{tpu_custom_call.1} parent=1 // loop_header_branch
      %18 = sbr.rel (%p16) target = $region8
    $region5: #{tpu_custom_call.1} parent=1 // loop_body
      %s20 = ssub.s32 %s15, 1
      %s21 = ssub.s32 %s15, 2
      %s28 = sadd.s32 1, %s23
      %p29 = scmp.ge.s32.totalorder %s28, 8
      %s30 = scalar_select %p29, 0, %s28
      %s31 = sadd.s32 1, %s22
      %s32 = scalar_select %p29, %s31, %s22
      %p33 = scmp.ge.s32.totalorder %s32, 2
      %s34 = scalar_select %p33, 0, %s32
      %s35 = ssub.s32 %s22, %s34
      %p36 = scmp.eq.s32.totalorder %s35, 0
      %s38 = sadd.s32 %s37, 1
      %s39 = scalar_select %p36, %s37, %s38
      %p42 = pneg %p36
      %p43 = scmp.eq.s32.totalorder %s15, 15
      %p44 = por %p42, %p43
      %p45 = scmp.ne.s32.totalorder %s37, %s40
      %p46 = scmp.eq.s32.totalorder %s15, 0
      %p47 = por %p45, %p46
      %p48 = scmp.ne.s32.totalorder %s37, %s40
      %p49 = scmp.eq.s32.totalorder %s20, 15
      %p50 = por %p48, %p49
      %p51 = scmp.ne.s32.totalorder %s40, %s41
      %p52 = scmp.eq.s32.totalorder %s20, 0
      %p53 = por %p51, %p52
      %p54 = scmp.ne.s32.totalorder %s40, %s41
      %p55 = scmp.eq.s32.totalorder %s21, 15
      %p56 = por %p54, %p55
      %p58 = scmp.ne.s32.totalorder %s41, %s57
      %p59 = scmp.eq.s32.totalorder %s21, 0
      %p60 = por %p58, %p59
      %s61 = ssub.s32 %s23, %s30
      %p62 = scmp.eq.s32.totalorder %s61, 0
      %s64 = sadd.s32 %s63, 1
      %s65 = scalar_select %p62, %s63, %s64
      %p68 = pneg %p62
      %p69 = scmp.eq.s32.totalorder %s15, 15
      %p70 = por %p68, %p69
      %p71 = scmp.ne.s32.totalorder %s63, %s66
      %p72 = scmp.eq.s32.totalorder %s15, 0
      %p73 = por %p71, %p72
      %p74 = scmp.ne.s32.totalorder %s63, %s66
      %p75 = scmp.eq.s32.totalorder %s20, 15
      %p76 = por %p74, %p75
      %p77 = scmp.ne.s32.totalorder %s66, %s67
      %p78 = scmp.eq.s32.totalorder %s20, 0
      %p79 = por %p77, %p78
      %p80 = scmp.ne.s32.totalorder %s66, %s67
      %p81 = scmp.eq.s32.totalorder %s21, 15
      %p82 = por %p80, %p81
      %p84 = scmp.ne.s32.totalorder %s67, %s83
      %p85 = scmp.eq.s32.totalorder %s21, 0
      %p86 = por %p84, %p85
      %s87 = ssub.s32 %s23, %s30
      %p88 = scmp.eq.s32.totalorder %s87, 0
      %s90 = sadd.s32 %s89, 1
      %s91 = scalar_select %p88, %s89, %s90
      %p94 = pneg %p88
      %p95 = scmp.eq.s32.totalorder %s15, 15
      %p96 = por %p94, %p95
      %p97 = scmp.ne.s32.totalorder %s89, %s92
      %p98 = scmp.eq.s32.totalorder %s15, 0
      %p99 = por %p97, %p98
      %p100 = scmp.ne.s32.totalorder %s89, %s92
      %p101 = scmp.eq.s32.totalorder %s20, 15
      %p102 = por %p100, %p101
      %p103 = scmp.ne.s32.totalorder %s92, %s93
      %p104 = scmp.eq.s32.totalorder %s20, 0
      %p105 = por %p103, %p104
      %p106 = scmp.ne.s32.totalorder %s92, %s93
      %p107 = scmp.eq.s32.totalorder %s21, 15
      %p108 = por %p106, %p107
      %p110 = scmp.ne.s32.totalorder %s93, %s109
      %p111 = scmp.eq.s32.totalorder %s21, 0
      %p112 = por %p110, %p111
      %s113 = ssub.s32 %s23, %s30
      %p114 = scmp.eq.s32.totalorder %s113, 0
      %s116 = sadd.s32 %s115, 1
      %s117 = scalar_select %p114, %s115, %s116
      %p120 = pneg %p114
      %p121 = scmp.eq.s32.totalorder %s15, 15
      %p122 = por %p120, %p121
      %p123 = scmp.ne.s32.totalorder %s115, %s118
      %p124 = scmp.eq.s32.totalorder %s15, 0
      %p125 = por %p123, %p124
      %p126 = scmp.ne.s32.totalorder %s115, %s118
      %p127 = scmp.eq.s32.totalorder %s20, 15
      %p128 = por %p126, %p127
      %p129 = scmp.ne.s32.totalorder %s118, %s119
      %p130 = scmp.eq.s32.totalorder %s20, 0
      %p131 = por %p129, %p130
      %p132 = scmp.ne.s32.totalorder %s118, %s119
      %p133 = scmp.eq.s32.totalorder %s21, 15
      %p134 = por %p132, %p133
      %p136 = scmp.ne.s32.totalorder %s119, %s135
      %p137 = scmp.eq.s32.totalorder %s21, 0
      %p138 = por %p136, %p137
      %s139 = ssub.s32 %s23, %s30
      %p140 = scmp.eq.s32.totalorder %s139, 0
      %s142 = sadd.s32 %s141, 1
      %s143 = scalar_select %p140, %s141, %s142
      %p146 = pneg %p140
      %p147 = scmp.eq.s32.totalorder %s15, 15
      %p148 = por %p146, %p147
      %p149 = scmp.ne.s32.totalorder %s141, %s144
      %p150 = scmp.eq.s32.totalorder %s15, 0
      %p151 = por %p149, %p150
      %p152 = scmp.ne.s32.totalorder %s141, %s144
      %p153 = scmp.eq.s32.totalorder %s20, 15
      %p154 = por %p152, %p153
      %p155 = scmp.ne.s32.totalorder %s144, %s145
      %p156 = scmp.eq.s32.totalorder %s20, 0
      %p157 = por %p155, %p156
      %p158 = scmp.ne.s32.totalorder %s144, %s145
      %p159 = scmp.eq.s32.totalorder %s21, 15
      %p160 = por %p158, %p159
      %p162 = scmp.ne.s32.totalorder %s145, %s161
      %p163 = scmp.eq.s32.totalorder %s21, 0
      %p164 = por %p162, %p163
      %s166 = sadd.s32 %s165, 1
      %p169 = scmp.eq.s32.totalorder %s15, 15
      %p170 = scmp.ne.s32.totalorder %s165, %s167
      %p171 = scmp.eq.s32.totalorder %s15, 0
      %p172 = por %p170, %p171
      %p173 = scmp.ne.s32.totalorder %s165, %s167
      %p174 = scmp.eq.s32.totalorder %s20, 15
      %p175 = por %p173, %p174
      %p176 = scmp.ne.s32.totalorder %s167, %s168
      %p177 = scmp.eq.s32.totalorder %s20, 0
      %p178 = por %p176, %p177
      %p179 = scmp.ne.s32.totalorder %s167, %s168
      %p180 = scmp.eq.s32.totalorder %s21, 15
      %p181 = por %p179, %p180
      %p183 = scmp.ne.s32.totalorder %s168, %s182
      %p184 = scmp.eq.s32.totalorder %s21, 0
      %p185 = por %p183, %p184
      %s186 = ssub.s32 %s22, %s34
      %p187 = scmp.eq.s32.totalorder %s186, 0
      %s189 = sadd.s32 %s188, 1
      %s190 = scalar_select %p187, %s188, %s189
      %p193 = pneg %p187
      %p194 = scmp.eq.s32.totalorder %s15, 15
      %p195 = por %p193, %p194
      %p196 = scmp.ne.s32.totalorder %s188, %s191
      %p197 = scmp.eq.s32.totalorder %s15, 0
      %p198 = por %p196, %p197
      %p199 = scmp.ne.s32.totalorder %s188, %s191
      %p200 = scmp.eq.s32.totalorder %s20, 15
      %p201 = por %p199, %p200
      %p202 = scmp.ne.s32.totalorder %s191, %s192
      %p203 = scmp.eq.s32.totalorder %s20, 0
      %p204 = por %p202, %p203
      %p205 = scmp.ne.s32.totalorder %s191, %s192
      %p206 = scmp.eq.s32.totalorder %s21, 15
      %p207 = por %p205, %p206
      %p209 = scmp.ne.s32.totalorder %s192, %s208
      %p210 = scmp.eq.s32.totalorder %s21, 0
      %p211 = por %p209, %p210
      %p212 = scmp.le.s32.totalorder 1, %s15
      %p213 = scmp.lt.s32.totalorder %s15, 17
      %p214 = pnand %p212, %p213
      %p215 = pneg %p214
      // Predicated region
      $region9: #{tpu_custom_call.1} parent=5 // pred_check
        _
      $region10: #{tpu_custom_call.1} parent=5 // pred_check_branch
        %217 = sbr.rel (%p214) target = $region12
      $region11: #{tpu_custom_call.1} parent=5 // pred_region
        %s218 = ssub.s32 %s15, 1
        // Predicated region
        $region13: #{tpu_custom_call.1} parent=11 // pred_check
          %p219 = pneg %p178
        $region14: #{tpu_custom_call.1} parent=11 // pred_check_branch
          %221 = sbr.rel (%p219) target = $region16
        $region15: #{tpu_custom_call.1} parent=11 // pred_region
          _
        $region16: #{tpu_custom_call.1} parent=11 // pred_fallthru
          _
      $region12: #{tpu_custom_call.1} parent=5 // pred_fallthru
        _
      %p222 = scmp.lt.s32.totalorder %s15, 16
      // Predicated region
      $region17: #{tpu_custom_call.1} parent=5 // pred_check
        %p223 = pneg %p222
      $region18: #{tpu_custom_call.1} parent=5 // pred_check_branch
        %225 = sbr.rel (%p223) target = $region20
      $region19: #{tpu_custom_call.1} parent=5 // pred_region
        // Predicated region
        $region21: #{tpu_custom_call.1} parent=19 // pred_check
          %p226 = pneg %p47
        $region22: #{tpu_custom_call.1} parent=19 // pred_check_branch
          %228 = sbr.rel (%p226) target = $region24
        $region23: #{tpu_custom_call.1} parent=19 // pred_region
          %p229 = scmp.lt.s32.totalorder %s22, 1
          %s230 = scalar_select %p229, %s22, 1
          %s231 = smul.addr %s230, 4
          %s232 = scalar_lea.vmem %s0, %s231
        $region24: #{tpu_custom_call.1} parent=19 // pred_fallthru
          _
        // Predicated region
        $region25: #{tpu_custom_call.1} parent=19 // pred_check
          %p233 = pneg %p73
        $region26: #{tpu_custom_call.1} parent=19 // pred_check_branch
          %235 = sbr.rel (%p233) target = $region28
        $region27: #{tpu_custom_call.1} parent=19 // pred_region
          %p236 = scmp.lt.s32.totalorder %s23, 7
          %s237 = scalar_select %p236, %s23, 7
          %s238 = smul.addr %s237, 4
          %s239 = smul.addr %s238, 4
          %s240 = scalar_lea.vmem %s1, %s239
        $region28: #{tpu_custom_call.1} parent=19 // pred_fallthru
          _
        // Predicated region
        $region29: #{tpu_custom_call.1} parent=19 // pred_check
          %p241 = pneg %p99
        $region30: #{tpu_custom_call.1} parent=19 // pred_check_branch
          %243 = sbr.rel (%p241) target = $region32
        $region31: #{tpu_custom_call.1} parent=19 // pred_region
          %p244 = scmp.lt.s32.totalorder %s23, 7
          %s245 = scalar_select %p244, %s23, 7
          %s246 = smul.addr %s245, 4
          %s247 = smul.addr %s246, 4
          %s248 = scalar_lea.vmem %s2, %s247
        $region32: #{tpu_custom_call.1} parent=19 // pred_fallthru
          _
        // Predicated region
        $region33: #{tpu_custom_call.1} parent=19 // pred_check
          %p249 = pneg %p125
        $region34: #{tpu_custom_call.1} parent=19 // pred_check_branch
          %251 = sbr.rel (%p249) target = $region36
        $region35: #{tpu_custom_call.1} parent=19 // pred_region
          %p252 = scmp.lt.s32.totalorder %s23, 7
          %s253 = scalar_select %p252, %s23, 7
          %s254 = smul.addr %s253, 4
          %s255 = smul.addr %s254, 4
          %s256 = scalar_lea.vmem %s3, %s255
        $region36: #{tpu_custom_call.1} parent=19 // pred_fallthru
          _
        // Predicated region
        $region37: #{tpu_custom_call.1} parent=19 // pred_check
          %p257 = pneg %p151
        $region38: #{tpu_custom_call.1} parent=19 // pred_check_branch
          %259 = sbr.rel (%p257) target = $region40
        $region39: #{tpu_custom_call.1} parent=19 // pred_region
          %p260 = scmp.lt.s32.totalorder %s23, 7
          %s261 = scalar_select %p260, %s23, 7
          %s262 = smul.addr %s261, 2
          %s263 = scalar_lea.vmem %s4, %s262
        $region40: #{tpu_custom_call.1} parent=19 // pred_fallthru
          _
      $region20: #{tpu_custom_call.1} parent=5 // pred_fallthru
        _
      %p264 = scmp.le.s32.totalorder 1, %s15
      %p265 = scmp.lt.s32.totalorder %s15, 17
      %p266 = pnand %p264, %p265
      %p267 = pneg %p266
      // Predicated region
      $region41: #{tpu_custom_call.1} parent=5 // pred_check
        _
      $region42: #{tpu_custom_call.1} parent=5 // pred_check_branch
        %269 = sbr.rel (%p266) target = $region44
      $region43: #{tpu_custom_call.1} parent=5 // pred_region
        %s270 = ssub.s32 %s15, 1
        %p271 = scmp.lt.s32.totalorder %s24, 1
        %s272 = scalar_select %p271, %s24, 1
        %s273 = smul.addr %s272, 4
        %s274 = scalar_lea.vmem %s0, %s273
        %p275 = pneg %p53
        %p276 = pneg %p50
        %p277 = scmp.lt.s32.totalorder %s25, 7
        %s278 = scalar_select %p277, %s25, 7
        %s279 = smul.addr %s278, 4
        %s280 = smul.addr %s279, 4
        %s281 = scalar_lea.vmem %s1, %s280
        %p282 = pneg %p79
        %p283 = pneg %p76
        %p284 = scmp.lt.s32.totalorder %s25, 7
        %s285 = scalar_select %p284, %s25, 7
        %s286 = smul.addr %s285, 4
        %s287 = smul.addr %s286, 4
        %s288 = scalar_lea.vmem %s2, %s287
        %p289 = pneg %p105
        %p290 = pneg %p102
        %p291 = scmp.lt.s32.totalorder %s25, 7
        %s292 = scalar_select %p291, %s25, 7
        %s293 = smul.addr %s292, 4
        %s294 = smul.addr %s293, 4
        %s295 = scalar_lea.vmem %s3, %s294
        %p296 = pneg %p131
        %p297 = pneg %p128
        %p298 = scmp.lt.s32.totalorder %s25, 7
        %s299 = scalar_select %p298, %s25, 7
        %s300 = smul.addr %s299, 2
        %s301 = scalar_lea.vmem %s4, %s300
        %p302 = pneg %p157
        %p303 = pneg %p154
        %p304 = pneg %p178
        %p305 = pneg %p175
        %p306 = pneg %p204
        %p307 = pneg %p201
        %s308 = sand.u32 %s191, 1
        %s309 = scalar_lea.sflag [#allocation4], %s308
        %s310 = sand.u32 %s191, 1
        %s311 = smul.addr %s310, 8
        %s312 = scalar_lea.vmem [#allocation3], %s311
        %p313 = scmp.lt.s32.totalorder %s24, 1
        %s314 = scalar_select %p313, %s24, 1
        %s315 = smul.addr %s314, 4
        %s316 = scalar_lea.vmem %s0, %s315
        %p317 = scmp.lt.s32.totalorder %s25, 7
        %s318 = scalar_select %p317, %s25, 7
        %s319 = smul.addr %s318, 4
        %s320 = smul.addr %s319, 4
        %s321 = scalar_lea.vmem %s1, %s320
        %p322 = scmp.lt.s32.totalorder %s25, 7
        %s323 = scalar_select %p322, %s25, 7
        %s324 = smul.addr %s323, 4
        %s325 = smul.addr %s324, 4
        %s326 = scalar_lea.vmem %s2, %s325
        %p327 = scmp.lt.s32.totalorder %s25, 7
        %s328 = scalar_select %p327, %s25, 7
        %s329 = smul.addr %s328, 4
        %s330 = smul.addr %s329, 4
        %s331 = scalar_lea.vmem %s3, %s330
        %p332 = scmp.lt.s32.totalorder %s25, 7
        %s333 = scalar_select %p332, %s25, 7
        %s334 = smul.addr %s333, 2
        %s335 = scalar_lea.vmem %s4, %s334
        %p337 = scmp.eq.s32.totalorder %s25, 0
        // Predicated region
        $region45: #{tpu_custom_call.1} parent=43 // pred_check
          %p338 = pneg %p337
        $region46: #{tpu_custom_call.1} parent=43 // pred_check_branch
          %340 = sbr.rel (%p338) target = $region48
        $region47: #{tpu_custom_call.1} parent=43 // pred_region
          %vm341 = vcmask 261120
          %342 = vst.msk [vmem:[#allocation2] sm:$0xff] %vm341, 0.0
        $region48: #{tpu_custom_call.1} parent=43 // pred_fallthru
          _
        %v343 = vld [vmem:[%s316] sm:$0xf]
        %v344 = vld [vmem:[%s321] sm:$0xf]
        %v345 = vld [vmem:[%s321 + $0x4] sm:$0xf]
        %v346 = vld [vmem:[%s321 + $0x8] sm:$0xf]
        %v347 = vld [vmem:[%s321 + $0xc] sm:$0xf]
        %v348 = vld [vmem:[%s326] sm:$0xf]
        %v349 = vld [vmem:[%s326 + $0x4] sm:$0xf]
        %v350 = vld [vmem:[%s326 + $0x8] sm:$0xf]
        %v351 = vld [vmem:[%s326 + $0xc] sm:$0xf]
        %v352 = vld [vmem:[%s331] sm:$0xf]
        %v353 = vld [vmem:[%s331 + $0x4] sm:$0xf]
        %v354 = vld [vmem:[%s331 + $0x8] sm:$0xf]
        %v355 = vld [vmem:[%s331 + $0xc] sm:$0xf]
        %v356 = vld [vmem:[%s335] sm:$0x3]
        %v361 = vunpack.c.l.b16 %v344
        %v362 = vunpack.c.l.b16 %v345
        %v363 = vunpack.c.l.b16 %v346
        %v364 = vunpack.c.l.b16 %v347
        %v365 = vpack.c.b16 %v362, %v361
        %v366 = vpack.c.b16 %v364, %v363
        %vm369 = vcmask 261120
        %v371 = vsel %vm369, %v343, 0
        %373 = vmatpush.bf16.msra.mxu0 0
        %374 = vmatpush.bf16.msra.mxu0 0
        %375 = vmatpush.bf16.msra.mxu0 0
        %376 = vmatpush.bf16.msra.mxu0 0
        %377 = vmatpush.bf16.msra.mxu0 0
        %378 = vmatpush.bf16.msra.mxu0 0
        %379 = vmatpush.bf16.msra.mxu0 %v366
        %380 = vmatpush.bf16.msra.mxu0 %v365
        %381 = vmatmul.bf16.gmra.mxu0 %v371
        %v382 = vpop.f32.mrf.mxu0
        %v383 = vadd.f32 0.0, %v382
        %v384 = vpop.f32.mrf.mxu0
        %385 = vdwg.mxu0
        %v390 = vunpack.c.l.b16 %v348
        %v391 = vunpack.c.l.b16 %v349
        %v392 = vunpack.c.l.b16 %v350
        %v393 = vunpack.c.l.b16 %v351
        %v394 = vpack.c.b16 %v391, %v390
        %v395 = vpack.c.b16 %v393, %v392
        %398 = vmatpush.bf16.msra.mxu0 0
        %399 = vmatpush.bf16.msra.mxu0 0
        %400 = vmatpush.bf16.msra.mxu0 0
        %401 = vmatpush.bf16.msra.mxu0 0
        %402 = vmatpush.bf16.msra.mxu0 0
        %403 = vmatpush.bf16.msra.mxu0 0
        %404 = vmatpush.bf16.msra.mxu0 %v395
        %405 = vmatpush.bf16.msra.mxu0 %v394
        %406 = vmatmul.bf16.gmra.mxu0 %v371
        %v407 = vpop.f32.mrf.mxu0
        %v408 = vadd.f32 0.0, %v407
        %v409 = vpop.f32.mrf.mxu0
        %410 = vdwg.mxu0
        %v415 = vunpack.c.l.b16 %v352
        %v416 = vunpack.c.l.b16 %v353
        %v417 = vunpack.c.l.b16 %v354
        %v418 = vunpack.c.l.b16 %v355
        %v419 = vpack.c.b16 %v416, %v415
        %v420 = vpack.c.b16 %v418, %v417
        %423 = vmatpush.bf16.msra.mxu0 0
        %424 = vmatpush.bf16.msra.mxu0 0
        %425 = vmatpush.bf16.msra.mxu0 0
        %426 = vmatpush.bf16.msra.mxu0 0
        %427 = vmatpush.bf16.msra.mxu0 0
        %428 = vmatpush.bf16.msra.mxu0 0
        %429 = vmatpush.bf16.msra.mxu0 %v420
        %430 = vmatpush.bf16.msra.mxu0 %v419
        %431 = vmatmul.bf16.gmra.mxu0 %v371
        %v432 = vpop.f32.mrf.mxu0
        %v433 = vadd.f32 0.0, %v432
        %v434 = vpop.f32.mrf.mxu0
        %435 = vdwg.mxu0
        %v436 = vmul.f32 %v383, 0.5
        %v437 = vpack.c.bf16 %v436, %v436
        %v438 = vpack.c.bf16 %v408, %v408
        %v439 = vpack.c.bf16 %v433, %v433
        %vm440 = vcmask 31744
        %v442 = vsel %vm440, %v437, 0
        %v445 = vsel %vm440, %v438, 0
        %447 = vmatpush.bf16.xpose.msra.mxu0 0
        %448 = vmatpush.bf16.xpose.msra.mxu0 0
        %449 = vmatpush.bf16.xpose.msra.mxu0 0
        %450 = vmatpush.bf16.xpose.msra.mxu0 0
        %451 = vmatpush.bf16.xpose.msra.mxu0 0
        %452 = vmatpush.bf16.xpose.msra.mxu0 0
        %453 = vmatpush.bf16.xpose.msra.mxu0 0
        %454 = vmatpush.bf16.xpose.msra.mxu0 %v445
        %455 = vmatmul.bf16.gmra.mxu0 %v442
        %v456 = vpop.f32.mrf.mxu0
        %v457 = vadd.f32 0.0, %v456
        %v458 = vpop.f32.mrf.mxu0
        %459 = vdwg.mxu0
        %vm460 = vcmask 64512
        %v461 = vsel %vm460, %v457, -inf
        %462 = vmax.xlane.f32.xlu0 %v461
        %v463 = vpop.xlane.xlu0 %462
        %v464 = vsub.f32 %v457, %v463
        %v465 = vmul.f32 %v464, 1.442695
        %v466 = vpow.pop %v465
        %v467 = vsel %vm460, %v466, 0.0
        %468 = vadd.xlane.f32.xlu0 %v467
        %v469 = vpop.xlane.xlu0 %468
        %v470 = vpack.c.bf16 %v466, %v466
        %v472 = vsel %vm460, %v470, 0
        %vm474 = vcmask 1043456
        %v476 = vsel %vm474, %v439, 0
        %478 = vmatpush.bf16.msra.mxu0 0
        %479 = vmatpush.bf16.msra.mxu0 0
        %480 = vmatpush.bf16.msra.mxu0 0
        %481 = vmatpush.bf16.msra.mxu0 0
        %482 = vmatpush.bf16.msra.mxu0 0
        %483 = vmatpush.bf16.msra.mxu0 0
        %484 = vmatpush.bf16.msra.mxu0 0
        %485 = vmatpush.bf16.msra.mxu0 %v476
        %486 = vmatmul.bf16.gmra.mxu0 %v472
        %v487 = vpop.f32.mrf.mxu0
        %v488 = vadd.f32 0.0, %v487
        %v489 = vpop.f32.mrf.mxu0
        %490 = vdwg.mxu0
        %v491 = vrcp.pop %v469
        %v492 = vmul.f32 %v488, %v491
        %v493 = vld [vmem:[#allocation2] sm:$0xff]
        %v494 = vpack.c.bf16 %v492, %v492
        %v496 = vsel %vm440, %v494, 0
        %vm498 = vcmask 1041408
        %v500 = vsel %vm498, %v356, 0
        %502 = vmatpush.bf16.msra.mxu0 0
        %503 = vmatpush.bf16.msra.mxu0 0
        %504 = vmatpush.bf16.msra.mxu0 0
        %505 = vmatpush.bf16.msra.mxu0 0
        %506 = vmatpush.bf16.msra.mxu0 0
        %507 = vmatpush.bf16.msra.mxu0 0
        %508 = vmatpush.bf16.msra.mxu0 0
        %509 = vmatpush.bf16.msra.mxu0 %v500
        %510 = vmatmul.bf16.gmra.mxu0 %v496
        %v511 = vpop.f32.mrf.mxu0
        %v512 = vadd.f32 0.0, %v511
        %v513 = vpop.f32.mrf.mxu0
        %514 = vdwg.mxu0
        %v515 = vadd.f32 %v493, %v512
        %516 = vst.msk [vmem:[#allocation2] sm:$0xff] %vm369, %v515
        %p517 = scmp.eq.s32.totalorder %s25, 7
        // Predicated region
        $region49: #{tpu_custom_call.1} parent=43 // pred_check
          %p518 = pneg %p517
        $region50: #{tpu_custom_call.1} parent=43 // pred_check_branch
          %520 = sbr.rel (%p518) target = $region52
        $region51: #{tpu_custom_call.1} parent=43 // pred_region
          %v521 = vld [vmem:[#allocation2] sm:$0xff]
          %v522 = vld [vmem:[%s5] sm:$0x1]
          %v524 = vperm.slane %v522, 0
          %v526 = vadd.f32 %v521, %v524
          %527 = vst.msk [vmem:[%s312] sm:$0xff] %vm369, %v526
        $region52: #{tpu_custom_call.1} parent=43 // pred_fallthru
          _
        %s528 = sand.u32 %s191, 1
        %s529 = scalar_lea.sflag [#allocation4], %s528
        %s530 = sand.u32 %s191, 1
        %s531 = smul.addr %s530, 8
        %s532 = scalar_lea.vmem [#allocation3], %s531
        // Predicated region
        $region53: #{tpu_custom_call.1} parent=43 // pred_check
          %p533 = pneg %p201
        $region54: #{tpu_custom_call.1} parent=43 // pred_check_branch
          %535 = sbr.rel (%p533) target = $region56
        $region55: #{tpu_custom_call.1} parent=43 // pred_region
          %537 = vsyncadd %s529, 0
          %s538 = smul.addr %s24, 8
          %s539 = scalar_lea.hbm %s6, %s538
          %s541 = sshll.u32 %s532, 4
          %s542 = int_to_ptr.vmem [resolvable:$true] %s541
          %s543 = sshll.u32 %s539, 4
          %s544 = int_to_ptr.hbm [resolvable:$true] %s543
          %546 = dma.vmem_to_hbm [thread:$0]  %s542, 128, %s544, %s529
        $region56: #{tpu_custom_call.1} parent=43 // pred_fallthru
          _
      $region44: #{tpu_custom_call.1} parent=5 // pred_fallthru
        _
      %p547 = scmp.le.s32.totalorder 2, %s15
      // Predicated region
      $region57: #{tpu_custom_call.1} parent=5 // pred_check
        %p548 = pneg %p547
      $region58: #{tpu_custom_call.1} parent=5 // pred_check_branch
        %550 = sbr.rel (%p548) target = $region60
      $region59: #{tpu_custom_call.1} parent=5 // pred_region
        %s551 = ssub.s32 %s15, 2
        // Predicated region
        $region61: #{tpu_custom_call.1} parent=59 // pred_check
          %p552 = pneg %p207
        $region62: #{tpu_custom_call.1} parent=59 // pred_check_branch
          %554 = sbr.rel (%p552) target = $region64
        $region63: #{tpu_custom_call.1} parent=59 // pred_region
          %s555 = sand.u32 %s192, 1
          %s556 = scalar_lea.sflag [#allocation4], %s555
          %s557 = sand.u32 %s192, 1
          %s558 = smul.addr %s557, 8
          %s559 = scalar_lea.vmem [#allocation3], %s558
          %561 = dma.done %s556, 128
        $region64: #{tpu_custom_call.1} parent=59 // pred_fallthru
          _
      $region60: #{tpu_custom_call.1} parent=5 // pred_fallthru
        _
    $region6: #{tpu_custom_call.1} parent=1 // loop_footer
      %s19 = sadd.s32 1, %s15
    $region7: #{tpu_custom_call.1} parent=1 // loop_footer_branch
      %14 = sbr.rel target = $region3
    $region8: #{tpu_custom_call.1} parent=1 // loop_exit
      _
    %562 = vsyncpa [#allocation4], 1
    %s563 = scalar_lea.sflag [#allocation4], 1
    %564 = vsyncpa %s563, 1

</llo_original>
